<compile_context>
chip_gen: v5e
topology: v5e:2x2
jax: 0.10.0
libtpu: 0.0.40
codegen_flags: <defaults>
</compile_context>

<pallas_src>
import jax
import jax.numpy as jnp
from jax.experimental import pallas as pl
from jax.experimental.pallas import tpu as pltpu
import numpy as np


# ----------------------------- Pallas kernel --------------------------------
def _pnn_forward_kernel(
    xT_ref,              # (D_in, TILE_B)   normalize already folded into W1/b1
    w1T_ref, b1T_ref,    # (H, D_in), (H, 1)
    w2T_ref, b2T_ref,    # (H, H),    (H, 1)
    w3T_ref, b3T_ref,    # (D_out, H),(D_out, 1)
    outT_ref,            # (D_out, TILE_B)  lane-dense single output
):
    xT = xT_ref[...]

    # MLP hot path: matmuls on the MXU (N = TILE_B lanes), elementwise on VPU.
    h1 = jnp.maximum(
        jnp.dot(w1T_ref[...], xT, preferred_element_type=jnp.float32)
        + b1T_ref[...], 0.0)
    h2 = jnp.maximum(
        jnp.dot(w2T_ref[...], h1, preferred_element_type=jnp.float32)
        + b2T_ref[...], 0.0)
    out = (jnp.dot(w3T_ref[...], h2, preferred_element_type=jnp.float32)
           + b3T_ref[...])

    half = out.shape[0] // 2

    # Softplus only on the var half (sublanes >= half), selected with a
    # sublane iota mask.  Thresholded form is equivalent to log(1+exp(x)) with
    # the inf fallback of the PyTorch reference, without a transient inf.
    sp = jnp.where(out > 20.0, out,
                   jnp.log(1.0 + jnp.exp(jnp.minimum(out, 20.0))))
    row = jax.lax.broadcasted_iota(jnp.int32, out.shape, 0)
    outT_ref[...] = jnp.where(row >= half, sp, out)


# ------------------------------- wrapper -------------------------------------
def _round_up(x, m):
    return ((x + m - 1) // m) * m


def pnn_forward(x, a_vec, b_vec, w1, b1, w2, b2, w3, b3, *, tile_b=4096):
    """Full PNNModel forward: returns (mean, var).

    The NormalizeLayer affine (a*x + b) is folded into the first Linear here
    (exact, since it is per-feature): W1' = a^T * W1, b1' = b @ W1 + b1.
    All operands are transposed so the batch dimension rides the lane axis.
    """
    B, d_in = x.shape
    h1_dim = w1.shape[1]
    h2_dim = w2.shape[1]
    d_out = w3.shape[1]
    half = d_out // 2

    # Fold NormalizeLayer into the first Linear (computed once, outside the
    # kernel) and transpose every parameter for the W^T @ x^T orientation.
    w1fT = (a_vec.reshape(d_in, 1) * w1).T              # (H, D_in)
    b1fT = (b_vec.reshape(1, d_in) @ w1 + b1).T         # (H, 1)
    w2T = w2.T                                          # (H, H)
    b2T = b2.T                                          # (H, 1)
    w3T = w3.T                                          # (D_out, H)
    b3T = b3.T                                          # (D_out, 1)

    xT = x.T                                            # (D_in, B): layout plumbing only

    # Batch maps to lanes: the tile must be a multiple of 128.  Cap it at half
    # the (rounded-up) batch so large batches produce >= 2 "parallel" grid
    # steps (v7x megacore / pipeline overlap); small batches use one tile.
    tile_b = min(tile_b, _round_up(pl.cdiv(max(B, 1), 2), 128))
    grid = (pl.cdiv(B, tile_b),)   # ragged last block handled by Pallas

    outT = pl.pallas_call(
        _pnn_forward_kernel,
        out_shape=jax.ShapeDtypeStruct((d_out, B), jnp.float32),
        grid_spec=pltpu.PrefetchScalarGridSpec(
            num_scalar_prefetch=0,
            grid=grid,
            in_specs=[
                pl.BlockSpec((d_in, tile_b), lambda i: (0, i)),    # xT: tiled on batch lanes
                pl.BlockSpec((h1_dim, d_in), lambda i: (0, 0)),    # weights/biases stay
                pl.BlockSpec((h1_dim, 1), lambda i: (0, 0)),       # VMEM-resident across
                pl.BlockSpec((h2_dim, h1_dim), lambda i: (0, 0)),  # grid iterations
                pl.BlockSpec((h2_dim, 1), lambda i: (0, 0)),
                pl.BlockSpec((d_out, h2_dim), lambda i: (0, 0)),
                pl.BlockSpec((d_out, 1), lambda i: (0, 0)),
            ],
            out_specs=pl.BlockSpec((d_out, tile_b), lambda i: (0, i)),
        ),
        compiler_params=pltpu.CompilerParams(
            dimension_semantics=("parallel",)),
    )(xT, w1fT, b1fT, w2T, b2T, w3T, b3T)

    # Split mean/var and transpose back to (B, d_out/2): cheap XLA ops outside.
    return outT[:half, :].T, outT[half:, :].T


# ------------------------ deterministic parameter init ----------------------
def xavier_uniform(key, fan_in, fan_out):
    """nn.init.xavier_uniform_ for a Linear weight; returned as (in, out)."""
    bound = np.sqrt(6.0 / (fan_in + fan_out))
    return jax.random.uniform(
        key, (fan_in, fan_out), dtype=jnp.float32, minval=-bound, maxval=bound)


def linear_bias(key, fan_in, fan_out):
    """PyTorch nn.Linear default bias init: U(-1/sqrt(fan_in), 1/sqrt(fan_in))."""
    bound = 1.0 / np.sqrt(fan_in)
    return jax.random.uniform(
        key, (1, fan_out), dtype=jnp.float32, minval=-bound, maxval=bound)


def make_normalize_ab(normalize_cfg, dim):
    """Replicates NormalizeLayer's per-feature a, b construction (glue code)."""
    a = np.zeros((dim,), dtype=np.float32)
    b = np.zeros((dim,), dtype=np.float32)
    prev = 0
    for x_min, x_max, u, l, length in zip(
        normalize_cfg["x_min"], normalize_cfg["x_max"],
        normalize_cfg["u"], normalize_cfg["l"], normalize_cfg["lengths"]):
        for i in range(prev, prev + length):
            a[i] = (u - l) / (x_max - x_min)
            b[i] = l - x_min * (u - l) / (x_max - x_min)
        prev += length
    return jnp.asarray(a).reshape(1, dim), jnp.asarray(b).reshape(1, dim)


# ----------------------------------- main ------------------------------------
if __name__ == "__main__":
    # Small shapes consistent with the module's forward.
    B = 2            # batch
    D_IN = 8         # input_size
    HIDDEN = 32      # layers = [32, 32]
    D_OUT = 8        # output_size (split into mean/var of 4 each)

    normalize_cfg = {
        "x_min": [0.0, -1.0],
        "x_max": [1.0, 1.0],
        "u": [1.0, 1.0],
        "l": [-1.0, 0.0],
        "lengths": [4, 4],   # sums to D_IN
    }
    a_vec, b_vec = make_normalize_ab(normalize_cfg, D_IN)

    key = jax.random.PRNGKey(0)
    k_x, k_w1, k_b1, k_w2, k_b2, k_w3, k_b3 = jax.random.split(key, 7)

    x = jax.random.normal(k_x, (B, D_IN), dtype=jnp.float32)

    w1 = xavier_uniform(k_w1, D_IN, HIDDEN)
    b1 = linear_bias(k_b1, D_IN, HIDDEN)
    w2 = xavier_uniform(k_w2, HIDDEN, HIDDEN)
    b2 = linear_bias(k_b2, HIDDEN, HIDDEN)
    w3 = xavier_uniform(k_w3, HIDDEN, D_OUT)
    b3 = linear_bias(k_b3, HIDDEN, D_OUT)

    mean, var = pnn_forward(x, a_vec, b_vec, w1, b1, w2, b2, w3, b3)
    jax.block_until_ready((mean, var))

    # Pure-JAX reference (original, un-folded, un-transposed math).
    xn = x * a_vec + b_vec
    r1 = jnp.maximum(xn @ w1 + b1, 0.0)
    r2 = jnp.maximum(r1 @ w2 + b2, 0.0)
    out = r2 @ w3 + b3
    ref_mean = out[:, : D_OUT // 2]
    raw_var = out[:, D_OUT // 2:]
    sp = jnp.log(1.0 + jnp.exp(raw_var))
    ref_var = jnp.where(sp == jnp.inf, raw_var, sp)

    assert mean.shape == (B, D_OUT // 2) and var.shape == (B, D_OUT // 2)
    np.testing.assert_allclose(np.asarray(mean), np.asarray(ref_mean), rtol=1e-5, atol=1e-5)
    np.testing.assert_allclose(np.asarray(var), np.asarray(ref_var), rtol=1e-5, atol=1e-5)

    print("KERNEL_OK")
</pallas_src>

<mosaic_0001>
module attributes {stable_mosaic.version = 11 : i64} {
  func.func @_pnn_forward_kernel(%arg0: i32, %arg1: memref<8x128xf32, #tpu.memory_space<vmem>>, %arg2: memref<32x8xf32, #tpu.memory_space<vmem>>, %arg3: memref<32x1xf32, #tpu.memory_space<vmem>>, %arg4: memref<32x32xf32, #tpu.memory_space<vmem>>, %arg5: memref<32x1xf32, #tpu.memory_space<vmem>>, %arg6: memref<8x32xf32, #tpu.memory_space<vmem>>, %arg7: memref<8x1xf32, #tpu.memory_space<vmem>>, %arg8: memref<8x128xf32, #tpu.memory_space<vmem>>) attributes {dimension_semantics = [#tpu.dimension_semantics<parallel>], iteration_bounds = array<i64: 1>, scalar_prefetch = 0 : i64, scratch_operands = 0 : i64, tpu.core_type = #tpu.core_type<tc>, window_params = [{transform_indices = @transform_0, window_bounds = array<i64: 8, 128>}, {pipeline_mode = #tpu.pipeline_mode<synchronous>, transform_indices = @transform_1, window_bounds = array<i64: 32, 8>}, {pipeline_mode = #tpu.pipeline_mode<synchronous>, transform_indices = @transform_2, window_bounds = array<i64: 32, 1>}, {pipeline_mode = #tpu.pipeline_mode<synchronous>, transform_indices = @transform_3, window_bounds = array<i64: 32, 32>}, {pipeline_mode = #tpu.pipeline_mode<synchronous>, transform_indices = @transform_4, window_bounds = array<i64: 32, 1>}, {pipeline_mode = #tpu.pipeline_mode<synchronous>, transform_indices = @transform_5, window_bounds = array<i64: 8, 32>}, {pipeline_mode = #tpu.pipeline_mode<synchronous>, transform_indices = @transform_6, window_bounds = array<i64: 8, 1>}, {transform_indices = @transform_7, window_bounds = array<i64: 8, 128>}]} {
    %c0 = arith.constant 0 : index
    %c0_0 = arith.constant 0 : index
    %0 = vector.load %arg1[%c0, %c0_0] : memref<8x128xf32, #tpu.memory_space<vmem>>, vector<8x128xf32>
    %c0_1 = arith.constant 0 : index
    %c0_2 = arith.constant 0 : index
    %1 = vector.load %arg2[%c0_1, %c0_2] : memref<32x8xf32, #tpu.memory_space<vmem>>, vector<32x8xf32>
    %cst = arith.constant dense<0.000000e+00> : vector<32x128xf32>
    %2 = tpu.matmul %1, %0, %cst {dimension_numbers = #tpu.dot_dimension_numbers<[1], [0], [0], [1], [0, 0, 1, 1], [], []>} : vector<32x8xf32>, vector<8x128xf32>, vector<32x128xf32> -> vector<32x128xf32>
    %c0_3 = arith.constant 0 : index
    %c0_4 = arith.constant 0 : index
    %3 = vector.load %arg3[%c0_3, %c0_4] : memref<32x1xf32, #tpu.memory_space<vmem>>, vector<32x1xf32>
    %4 = vector.broadcast %3 : vector<32x1xf32> to vector<32x128xf32>
    %5 = arith.addf %2, %4 : vector<32x128xf32>
    %cst_5 = arith.constant 0.000000e+00 : f32
    %6 = vector.broadcast %cst_5 : f32 to vector<32x128xf32>
    %7 = arith.maximumf %5, %6 : vector<32x128xf32>
    %c0_6 = arith.constant 0 : index
    %c0_7 = arith.constant 0 : index
    %8 = vector.load %arg4[%c0_6, %c0_7] : memref<32x32xf32, #tpu.memory_space<vmem>>, vector<32x32xf32>
    %cst_8 = arith.constant dense<0.000000e+00> : vector<32x128xf32>
    %9 = tpu.matmul %8, %7, %cst_8 {dimension_numbers = #tpu.dot_dimension_numbers<[1], [0], [0], [1], [0, 0, 1, 1], [], []>} : vector<32x32xf32>, vector<32x128xf32>, vector<32x128xf32> -> vector<32x128xf32>
    %c0_9 = arith.constant 0 : index
    %c0_10 = arith.constant 0 : index
    %10 = vector.load %arg5[%c0_9, %c0_10] : memref<32x1xf32, #tpu.memory_space<vmem>>, vector<32x1xf32>
    %11 = vector.broadcast %10 : vector<32x1xf32> to vector<32x128xf32>
    %12 = arith.addf %9, %11 : vector<32x128xf32>
    %cst_11 = arith.constant 0.000000e+00 : f32
    %13 = vector.broadcast %cst_11 : f32 to vector<32x128xf32>
    %14 = arith.maximumf %12, %13 : vector<32x128xf32>
    %c0_12 = arith.constant 0 : index
    %c0_13 = arith.constant 0 : index
    %15 = vector.load %arg6[%c0_12, %c0_13] : memref<8x32xf32, #tpu.memory_space<vmem>>, vector<8x32xf32>
    %cst_14 = arith.constant dense<0.000000e+00> : vector<8x128xf32>
    %16 = tpu.matmul %15, %14, %cst_14 {dimension_numbers = #tpu.dot_dimension_numbers<[1], [0], [0], [1], [0, 0, 1, 1], [], []>} : vector<8x32xf32>, vector<32x128xf32>, vector<8x128xf32> -> vector<8x128xf32>
    %c0_15 = arith.constant 0 : index
    %c0_16 = arith.constant 0 : index
    %17 = vector.load %arg7[%c0_15, %c0_16] : memref<8x1xf32, #tpu.memory_space<vmem>>, vector<8x1xf32>
    %18 = vector.broadcast %17 : vector<8x1xf32> to vector<8x128xf32>
    %19 = arith.addf %16, %18 : vector<8x128xf32>
    %cst_17 = arith.constant 2.000000e+01 : f32
    %20 = vector.broadcast %cst_17 : f32 to vector<8x128xf32>
    %21 = arith.cmpf ogt, %19, %20 : vector<8x128xf32>
    %cst_18 = arith.constant 2.000000e+01 : f32
    %22 = vector.broadcast %cst_18 : f32 to vector<8x128xf32>
    %23 = arith.minimumf %19, %22 : vector<8x128xf32>
    %24 = math.exp %23 : vector<8x128xf32>
    %cst_19 = arith.constant 1.000000e+00 : f32
    %25 = vector.broadcast %cst_19 : f32 to vector<8x128xf32>
    %26 = arith.addf %25, %24 : vector<8x128xf32>
    %27 = math.log %26 : vector<8x128xf32>
    %28 = arith.select %21, %19, %27 : vector<8x128xi1>, vector<8x128xf32>
    %29 = tpu.iota {dimensions = array<i32: 0>} : vector<8x128xi32>
    %c4_i32 = arith.constant 4 : i32
    %30 = vector.broadcast %c4_i32 : i32 to vector<8x128xi32>
    %31 = arith.cmpi sge, %29, %30 : vector<8x128xi32>
    %32 = arith.select %31, %28, %19 : vector<8x128xi1>, vector<8x128xf32>
    %c0_20 = arith.constant 0 : index
    %c0_21 = arith.constant 0 : index
    %33 = vector.load %arg8[%c0_20, %c0_21] : memref<8x128xf32, #tpu.memory_space<vmem>>, vector<8x128xf32>
    tpu.vector_store %arg8[%c0_20, %c0_21], %32 {strides = array<i32>} : memref<8x128xf32, #tpu.memory_space<vmem>>, vector<8x128xf32>,
    return
  }
  func.func @transform_0(%arg0: i32) -> (i32, i32) {
    %c0_i32 = arith.constant 0 : i32
    %c0_i32_0 = arith.constant 0 : i32
    return %c0_i32, %arg0 : i32, i32
  }
  func.func @transform_1(%arg0: i32) -> (i32, i32) {
    %c0_i32 = arith.constant 0 : i32
    %c0_i32_0 = arith.constant 0 : i32
    %c0_i32_1 = arith.constant 0 : i32
    return %c0_i32, %c0_i32_0 : i32, i32
  }
  func.func @transform_2(%arg0: i32) -> (i32, i32) {
    %c0_i32 = arith.constant 0 : i32
    %c0_i32_0 = arith.constant 0 : i32
    %c0_i32_1 = arith.constant 0 : i32
    return %c0_i32, %c0_i32_0 : i32, i32
  }
  func.func @transform_3(%arg0: i32) -> (i32, i32) {
    %c0_i32 = arith.constant 0 : i32
    %c0_i32_0 = arith.constant 0 : i32
    %c0_i32_1 = arith.constant 0 : i32
    return %c0_i32, %c0_i32_0 : i32, i32
  }
  func.func @transform_4(%arg0: i32) -> (i32, i32) {
    %c0_i32 = arith.constant 0 : i32
    %c0_i32_0 = arith.constant 0 : i32
    %c0_i32_1 = arith.constant 0 : i32
    return %c0_i32, %c0_i32_0 : i32, i32
  }
  func.func @transform_5(%arg0: i32) -> (i32, i32) {
    %c0_i32 = arith.constant 0 : i32
    %c0_i32_0 = arith.constant 0 : i32
    %c0_i32_1 = arith.constant 0 : i32
    return %c0_i32, %c0_i32_0 : i32, i32
  }
  func.func @transform_6(%arg0: i32) -> (i32, i32) {
    %c0_i32 = arith.constant 0 : i32
    %c0_i32_0 = arith.constant 0 : i32
    %c0_i32_1 = arith.constant 0 : i32
    return %c0_i32, %c0_i32_0 : i32, i32
  }
  func.func @transform_7(%arg0: i32) -> (i32, i32) {
    %c0_i32 = arith.constant 0 : i32
    %c0_i32_0 = arith.constant 0 : i32
    return %c0_i32, %arg0 : i32, i32
  }
}

</mosaic_0001>

<llo_original>
// kernel: tpu_custom_call.1
$region0: #{tpu_custom_call.1}
  #allocation0 [shape = 'u32[]', space=smem, size = 0x4, offset = 0x4, fixed_abs, tag = 'smem constant byte address 0x4 - core index']
  #allocation1 [shape = 'u32[72,128]{1,0:T(1,128)}', space=vmem, size = 0x9000, scoped, tag = 'internal scratch']
  %s0 = inlined_call_operand.vmem [shape: f32[8,2], index: 0, kind: input, shape index: {}]
  %s1 = inlined_call_operand.vmem [shape: f32[32,8], index: 1, kind: input, shape index: {}]
  %s2 = inlined_call_operand.vmem [shape: f32[32,1], index: 2, kind: input, shape index: {}]
  %s3 = inlined_call_operand.vmem [shape: f32[32,32], index: 3, kind: input, shape index: {}]
  %s4 = inlined_call_operand.vmem [shape: f32[32,1], index: 4, kind: input, shape index: {}]
  %s5 = inlined_call_operand.vmem [shape: f32[8,32], index: 5, kind: input, shape index: {}]
  %s6 = inlined_call_operand.vmem [shape: f32[8,1], index: 6, kind: input, shape index: {}]
  %s7 = inlined_call_operand.vmem [shape: f32[8,2], index: 7, kind: output, shape index: {}]
  %s8 = sld [smem:[#allocation0]]
  $region38: #{tpu_custom_call.1} parent=0
    _
  %s10 = ssub.s32 1, %s8
  %s11 = scalar_select 0, %s10, %s8
  // Predicated region
  $region2: #{tpu_custom_call.1} parent=0 // pred_check
    _
  $region3: #{tpu_custom_call.1} parent=0 // pred_check_branch
    %13 = sbr.rel (0) target = $region5
  $region4: #{tpu_custom_call.1} parent=0 // pred_region
    _
  $region5: #{tpu_custom_call.1} parent=0 // pred_fallthru
    _
  // Predicated region
  $region6: #{tpu_custom_call.1} parent=0 // pred_check
    _
  $region7: #{tpu_custom_call.1} parent=0 // pred_check_branch
    %15 = sbr.rel (0) target = $region9
  $region8: #{tpu_custom_call.1} parent=0 // pred_region
    _
  $region9: #{tpu_custom_call.1} parent=0 // pred_fallthru
    _
  // Predicated region
  $region10: #{tpu_custom_call.1} parent=0 // pred_check
    _
  $region11: #{tpu_custom_call.1} parent=0 // pred_check_branch
    %17 = sbr.rel (0) target = $region13
  $region12: #{tpu_custom_call.1} parent=0 // pred_region
    _
  $region13: #{tpu_custom_call.1} parent=0 // pred_fallthru
    _
  // Predicated region
  $region14: #{tpu_custom_call.1} parent=0 // pred_check
    _
  $region15: #{tpu_custom_call.1} parent=0 // pred_check_branch
    %19 = sbr.rel (0) target = $region17
  $region16: #{tpu_custom_call.1} parent=0 // pred_region
    _
  $region17: #{tpu_custom_call.1} parent=0 // pred_fallthru
    _
  // Predicated region
  $region18: #{tpu_custom_call.1} parent=0 // pred_check
    _
  $region19: #{tpu_custom_call.1} parent=0 // pred_check_branch
    %21 = sbr.rel (0) target = $region21
  $region20: #{tpu_custom_call.1} parent=0 // pred_region
    _
  $region21: #{tpu_custom_call.1} parent=0 // pred_fallthru
    _
  // Predicated region
  $region22: #{tpu_custom_call.1} parent=0 // pred_check
    _
  $region23: #{tpu_custom_call.1} parent=0 // pred_check_branch
    %23 = sbr.rel (0) target = $region25
  $region24: #{tpu_custom_call.1} parent=0 // pred_region
    _
  $region25: #{tpu_custom_call.1} parent=0 // pred_fallthru
    _
  // Predicated region
  $region26: #{tpu_custom_call.1} parent=0 // pred_check
    _
  $region27: #{tpu_custom_call.1} parent=0 // pred_check_branch
    %25 = sbr.rel (0) target = $region29
  $region28: #{tpu_custom_call.1} parent=0 // pred_region
    _
  $region29: #{tpu_custom_call.1} parent=0 // pred_fallthru
    _
  %v26 = vld [vmem:[%s0] sm:$0xff]
  %v27 = vld [vmem:[%s1] sm:$0xff]
  %v28 = vld [vmem:[%s1 + $0x8] sm:$0xff]
  %v29 = vld [vmem:[%s1 + $0x10] sm:$0xff]
  %v30 = vld [vmem:[%s1 + $0x18] sm:$0xff]
  %v31 = vld [vmem:[%s2] sm:$0xff]
  %v32 = vld [vmem:[%s2 + $0x8] sm:$0xff]
  %v33 = vld [vmem:[%s2 + $0x10] sm:$0xff]
  %v34 = vld [vmem:[%s2 + $0x18] sm:$0xff]
  %36 = vset.pattern.permute.xlu0 0
  %37 = vperm.xlu0 %36, %v31
  %v38 = vpop.permute.xlu0 %37
  %41 = vset.pattern.permute.xlu0 0
  %42 = vperm.xlu0 %41, %v32
  %v43 = vpop.permute.xlu0 %42
  %46 = vset.pattern.permute.xlu0 0
  %47 = vperm.xlu0 %46, %v33
  %v48 = vpop.permute.xlu0 %47
  %51 = vset.pattern.permute.xlu0 0
  %52 = vperm.xlu0 %51, %v34
  %v53 = vpop.permute.xlu0 %52
  %vm55 = vcmask 64512
  %v57 = vsel %vm55, %v27, 0
  %v60 = vsel %vm55, %v28, 0
  %v63 = vsel %vm55, %v29, 0
  %v66 = vsel %vm55, %v30, 0
  %68 = vmatpush.msra.mxu0 0.0
  %69 = vmatpush.msra.mxu0 0.0
  %70 = vmatpush.msra.mxu0 0.0
  %71 = vmatpush.msra.mxu0 0.0
  %72 = vmatpush.msra.mxu0 0.0
  %73 = vmatpush.msra.mxu0 0.0
  %74 = vmatpush.msra.mxu0 0.0
  %75 = vmatpush.msra.mxu0 0.0
  %76 = vmatpush.msra.mxu0 0.0
  %77 = vmatpush.msra.mxu0 0.0
  %78 = vmatpush.msra.mxu0 0.0
  %79 = vmatpush.msra.mxu0 0.0
  %80 = vmatpush.msra.mxu0 0.0
  %81 = vmatpush.msra.mxu0 0.0
  %82 = vmatpush.msra.mxu0 0.0
  %83 = vmatpush.msra.mxu0 %v26
  %84 = vmatmul.f32.gmra.mxu0 %v57
  %v85 = vpop.f32.mrf.mxu0
  %v86 = vadd.f32 %v38, %v85
  %87 = vmatmul.f32.gmra.mxu0 %v60
  %v88 = vpop.f32.mrf.mxu0
  %v89 = vadd.f32 %v43, %v88
  %90 = vmatmul.f32.gmra.mxu0 %v63
  %v91 = vpop.f32.mrf.mxu0
  %v92 = vadd.f32 %v48, %v91
  %93 = vmatmul.f32.gmra.mxu0 %v66
  %v94 = vpop.f32.mrf.mxu0
  %v95 = vadd.f32 %v53, %v94
  %96 = vdwg.mxu0
  %v97 = vmax.f32 %v86, 0.0
  %v98 = vmax.f32 %v89, 0.0
  %v99 = vmax.f32 %v92, 0.0
  %v100 = vmax.f32 %v95, 0.0
  %v101 = vld [vmem:[%s3] sm:$0xff]
  %v102 = vld [vmem:[%s3 + $0x8] sm:$0xff]
  %v103 = vld [vmem:[%s3 + $0x10] sm:$0xff]
  %v104 = vld [vmem:[%s3 + $0x18] sm:$0xff]
  %v105 = vld [vmem:[%s4] sm:$0xff]
  %v106 = vld [vmem:[%s4 + $0x8] sm:$0xff]
  %v107 = vld [vmem:[%s4 + $0x10] sm:$0xff]
  %v108 = vld [vmem:[%s4 + $0x18] sm:$0xff]
  %110 = vset.pattern.permute.xlu0 0
  %111 = vperm.xlu0 %110, %v105
  %v112 = vpop.permute.xlu0 %111
  %115 = vset.pattern.permute.xlu0 0
  %116 = vperm.xlu0 %115, %v106
  %v117 = vpop.permute.xlu0 %116
  %120 = vset.pattern.permute.xlu0 0
  %121 = vperm.xlu0 %120, %v107
  %v122 = vpop.permute.xlu0 %121
  %125 = vset.pattern.permute.xlu0 0
  %126 = vperm.xlu0 %125, %v108
  %v127 = vpop.permute.xlu0 %126
  %vm129 = vcmask 261120
  %v131 = vsel %vm129, %v101, 0
  %v134 = vsel %vm129, %v102, 0
  %v137 = vsel %vm129, %v103, 0
  %v140 = vsel %vm129, %v104, 0
  %142 = vmatpush.msra.mxu0 0.0
  %143 = vmatpush.msra.mxu0 0.0
  %144 = vmatpush.msra.mxu0 0.0
  %145 = vmatpush.msra.mxu0 0.0
  %146 = vmatpush.msra.mxu0 0.0
  %147 = vmatpush.msra.mxu0 0.0
  %148 = vmatpush.msra.mxu0 0.0
  %149 = vmatpush.msra.mxu0 0.0
  %150 = vmatpush.msra.mxu0 0.0
  %151 = vmatpush.msra.mxu0 0.0
  %152 = vmatpush.msra.mxu0 0.0
  %153 = vmatpush.msra.mxu0 0.0
  %154 = vmatpush.msra.mxu0 %v100
  %155 = vmatpush.msra.mxu0 %v99
  %156 = vmatpush.msra.mxu0 %v98
  %157 = vmatpush.msra.mxu0 %v97
  %158 = vmatmul.f32.gmra.mxu0 %v131
  %v159 = vpop.f32.mrf.mxu0
  %v160 = vadd.f32 %v112, %v159
  %161 = vmatmul.f32.gmra.mxu0 %v134
  %v162 = vpop.f32.mrf.mxu0
  %v163 = vadd.f32 %v117, %v162
  %164 = vmatmul.f32.gmra.mxu0 %v137
  %v165 = vpop.f32.mrf.mxu0
  %v166 = vadd.f32 %v122, %v165
  %167 = vmatmul.f32.gmra.mxu0 %v140
  %v168 = vpop.f32.mrf.mxu0
  %v169 = vadd.f32 %v127, %v168
  %170 = vdwg.mxu0
  %v171 = vmax.f32 %v160, 0.0
  %v172 = vmax.f32 %v163, 0.0
  %v173 = vmax.f32 %v166, 0.0
  %v174 = vmax.f32 %v169, 0.0
  %v175 = vld [vmem:[%s5] sm:$0xff]
  %v176 = vld [vmem:[%s6] sm:$0xff]
  %178 = vset.pattern.permute.xlu0 0
  %179 = vperm.xlu0 %178, %v176
  %v180 = vpop.permute.xlu0 %179
  %v183 = vsel %vm129, %v175, 0
  %185 = vmatpush.msra.mxu0 0.0
  %186 = vmatpush.msra.mxu0 0.0
  %187 = vmatpush.msra.mxu0 0.0
  %188 = vmatpush.msra.mxu0 0.0
  %189 = vmatpush.msra.mxu0 0.0
  %190 = vmatpush.msra.mxu0 0.0
  %191 = vmatpush.msra.mxu0 0.0
  %192 = vmatpush.msra.mxu0 0.0
  %193 = vmatpush.msra.mxu0 0.0
  %194 = vmatpush.msra.mxu0 0.0
  %195 = vmatpush.msra.mxu0 0.0
  %196 = vmatpush.msra.mxu0 0.0
  %197 = vmatpush.msra.mxu0 %v174
  %198 = vmatpush.msra.mxu0 %v173
  %199 = vmatpush.msra.mxu0 %v172
  %200 = vmatpush.msra.mxu0 %v171
  %201 = vmatmul.f32.gmra.mxu0 %v183
  %v202 = vpop.f32.mrf.mxu0
  %v203 = vadd.f32 %v180, %v202
  %204 = vdwg.mxu0
  %vm205 = vcmp.gt.f32.partialorder %v203, 20.0
  %v206 = vmin.f32 %v203, 20.0
  %v207 = vmul.f32 %v206, 1.442695
  %v208 = vpow.pop %v207
  %v209 = vadd.f32 %v208, 1.0
  %v210 = vlog2.pop %v209
  %v211 = vmul.f32 %v210, 0.6931472
  %v212 = vsel %vm205, %v203, %v211
  %v213 = vlaneseq
  %v214 = vshrl.u32 %v213, 7
  %vm215 = vcmp.ge.s32.totalorder %v214, 4
  %v216 = vsel %vm215, %v212, %v203
  %217 = vst [vmem:[%s7] sm:$0xff] %v216
  // Predicated region
  $region30: #{tpu_custom_call.1} parent=0 // pred_check
    _
  $region31: #{tpu_custom_call.1} parent=0 // pred_check_branch
    %219 = sbr.rel (0) target = $region33
  $region32: #{tpu_custom_call.1} parent=0 // pred_region
    _
  $region33: #{tpu_custom_call.1} parent=0 // pred_fallthru
    _
  // Predicated region
  $region34: #{tpu_custom_call.1} parent=0 // pred_check
    _
  $region35: #{tpu_custom_call.1} parent=0 // pred_check_branch
    %221 = sbr.rel (0) target = $region37
  $region36: #{tpu_custom_call.1} parent=0 // pred_region
    _
  $region37: #{tpu_custom_call.1} parent=0 // pred_fallthru
    _

</llo_original>
